<compile_context>
chip_gen: v5e
topology: v5e:2x2
jax: 0.10.0
libtpu: 0.0.40
codegen_flags: <defaults>
</compile_context>

<pallas_src>
import functools

import jax
import jax.numpy as jnp
from jax import lax
from jax.experimental import pallas as pl
from jax.experimental.pallas import tpu as pltpu

_LANE = 128
_SUBLANE = 8


def _round_up(v, m):
    return (v + m - 1) // m * m


def _skip_conv1d_kernel(x_ref, xh_ref, w_ref, b_ref, o_ref, *, k_taps, crop0):
    # x_ref : (1, C_p, T_TILE)   current time tile
    # xh_ref: (1, C_p, 128)      halo = first 128 columns of the next tile
    # w_ref : (C_p, K*C_p)       fused, tap-major weights (single MXU matmul)
    # b_ref : (C_p, 1)           bias (fp32, broadcast over lanes)
    # o_ref : (1, C_p, T_TILE)
    t_tile = o_ref.shape[2]

    # Extended tile covering the conv footprint of every output column.
    x_ext = jnp.concatenate([x_ref[0], xh_ref[0]], axis=-1)   # (C_p, T_TILE+128)

    # Stack the K lane-shifted views along the contraction (sublane) axis so
    # the whole conv is ONE matmul with contraction depth K*C_p.
    taps = [x_ext[:, k:k + t_tile] for k in range(k_taps)]
    rhs = jnp.concatenate(taps, axis=0)                       # (K*C_p, T_TILE)

    acc = jnp.dot(w_ref[...], rhs, preferred_element_type=jnp.float32)
    acc = acc + b_ref[...]                                    # (C_p, T_TILE)

    # Skip connection: inp[..., crop0 + j] is exactly tap `crop0` (crop0 <= K-1),
    # already resident in VMEM — no extra load.
    skip = taps[crop0].astype(jnp.float32)
    o_ref[0, :, :] = (acc + skip).astype(o_ref.dtype)


def skip_forward(x, w, b, crop=(1, 1), *, t_tile=1024):
    """_Skip forward: x[..., crop[0]:-crop[1]] + Conv1d(x) (VALID conv + bias)."""
    N, C, T = x.shape
    C_out, C_in, K = w.shape
    assert C_in == C and C_out == C, "skip add requires C_out == C_in == C"
    crop0, crop1 = crop
    assert crop0 >= 0 and crop1 >= 0
    T_out = T - K + 1
    assert T_out == T - crop0 - crop1, "crop must match conv output length"
    assert T_out >= 1
    assert K - 1 <= _LANE, "halo block (128) must cover the conv footprint"

    # ---- Channel padding (sublane multiple) + fused tap-major weight layout.
    C_p = _round_up(C, _SUBLANE)
    w_p = jnp.pad(w, ((0, C_p - C_out), (0, C_p - C_in), (0, 0)))
    # W_fused[o, k*C_p + i] = w[o, i, k]  -> matches RHS rows stacked per tap.
    w_fused = jnp.transpose(w_p, (0, 2, 1)).reshape(C_p, K * C_p).astype(x.dtype)
    b_p = jnp.pad(b.astype(jnp.float32), (0, C_p - C_out)).reshape(C_p, 1)

    # ---- Time tiling: lane-dense output tiles + one 128-wide halo block.
    # Cap the tile so the per-step working set (in+halo+acc+out, double
    # buffered) stays comfortably inside the VMEM budget even for large C.
    itemsize = x.dtype.itemsize
    bytes_per_lane = C_p * (3 * itemsize + 2 * 4)     # x, out, rhs-ish + fp32 acc/skip
    t_cap = max(_LANE, (4 * 1024 * 1024) // max(bytes_per_lane, 1))
    t_tile = min(t_tile, t_cap)
    t_tile = max(_LANE, min(_round_up(T_out, _LANE), _round_up(t_tile, _LANE)))
    nt = pl.cdiv(T_out, t_tile)
    T_pad = nt * t_tile + _LANE                       # room for the halo block
    x_p = jnp.pad(x, ((0, 0), (0, C_p - C), (0, T_pad - T)))

    halo_blocks = t_tile // _LANE
    kernel = functools.partial(_skip_conv1d_kernel, k_taps=K, crop0=crop0)

    cost = pl.CostEstimate(
        flops=2 * N * C_out * C_in * K * T_out,
        transcendentals=0,
        bytes_accessed=(x_p.size * itemsize
                        + w_fused.size * w_fused.dtype.itemsize
                        + b_p.size * b_p.dtype.itemsize
                        + N * C_p * nt * t_tile * itemsize),
    )

    out_p = pl.pallas_call(
        kernel,
        out_shape=jax.ShapeDtypeStruct((N, C_p, nt * t_tile), x.dtype),
        grid_spec=pltpu.PrefetchScalarGridSpec(
            num_scalar_prefetch=0,
            grid=(N, nt),
            in_specs=[
                # current time tile
                pl.BlockSpec((1, C_p, t_tile), lambda n, t: (n, 0, t)),
                # halo: first 128 columns of the next tile (block-aligned)
                pl.BlockSpec((1, C_p, _LANE),
                             lambda n, t: (n, 0, (t + 1) * halo_blocks)),
                # grid-invariant operands (same block index every step -> no re-DMA)
                pl.BlockSpec((C_p, K * C_p), lambda n, t: (0, 0)),
                pl.BlockSpec((C_p, 1), lambda n, t: (0, 0)),
            ],
            out_specs=pl.BlockSpec((1, C_p, t_tile), lambda n, t: (n, 0, t)),
        ),
        compiler_params=pltpu.CompilerParams(
            dimension_semantics=("parallel", "parallel"),
            vmem_limit_bytes=32 * 1024 * 1024,
        ),
        cost_estimate=cost,
    )(x_p, x_p, w_fused, b_p)

    # Crop channel / time padding outside the kernel (kept lane-dense inside).
    return out_p[:, :C_out, :T_out]


if __name__ == "__main__":
    key = jax.random.PRNGKey(0)
    k1, k2, k3 = jax.random.split(key, 3)

    N, C, T, K = 2, 4, 16, 3
    x = jax.random.normal(k1, (N, C, T), jnp.float32)

    # Deterministic Conv1d-style init (uniform in +/- 1/sqrt(fan_in)).
    fan_in = C * K
    bound = 1.0 / (fan_in ** 0.5)
    w = jax.random.uniform(k2, (C, C, K), jnp.float32, -bound, bound)
    b = jax.random.uniform(k3, (C,), jnp.float32, -bound, bound)

    out = jax.block_until_ready(skip_forward(x, w, b, crop=(1, 1)))

    # Pure-JAX reference:  inp[..., 1:-1] + conv1d(inp)
    conv = lax.conv_general_dilated(
        x, w, window_strides=(1,), padding="VALID",
        dimension_numbers=("NCH", "OIH", "NCH"),
        precision=lax.Precision.HIGHEST,
    ) + b.reshape(1, C, 1)
    ref = x[..., 1:-1] + conv

    assert out.shape == (N, C, T - 2)
    assert jnp.allclose(out, ref, atol=1e-4, rtol=1e-4), "mismatch vs reference"
    print("KERNEL_OK")
</pallas_src>

<mosaic_0001>
module attributes {stable_mosaic.version = 11 : i64} {
  func.func @_skip_conv1d_kernel(%arg0: i32, %arg1: i32, %arg2: memref<1x8x128xf32, #tpu.memory_space<vmem>>, %arg3: memref<1x8x128xf32, #tpu.memory_space<vmem>>, %arg4: memref<8x24xf32, #tpu.memory_space<vmem>>, %arg5: memref<8x1xf32, #tpu.memory_space<vmem>>, %arg6: memref<1x8x128xf32, #tpu.memory_space<vmem>>) attributes {dimension_semantics = [#tpu.dimension_semantics<parallel>, #tpu.dimension_semantics<parallel>], iteration_bounds = array<i64: 2, 1>, scalar_prefetch = 0 : i64, scratch_operands = 0 : i64, tpu.core_type = #tpu.core_type<tc>, window_params = [{transform_indices = @transform_0, window_bounds = array<i64: 1, 8, 128>}, {transform_indices = @transform_1, window_bounds = array<i64: 1, 8, 128>}, {pipeline_mode = #tpu.pipeline_mode<synchronous>, transform_indices = @transform_2, window_bounds = array<i64: 8, 24>}, {pipeline_mode = #tpu.pipeline_mode<synchronous>, transform_indices = @transform_3, window_bounds = array<i64: 8, 1>}, {transform_indices = @transform_4, window_bounds = array<i64: 1, 8, 128>}]} {
    %c0 = arith.constant 0 : index
    %c0_0 = arith.constant 0 : index
    %c0_1 = arith.constant 0 : index
    %0 = vector.load %arg2[%c0, %c0_0, %c0_1] : memref<1x8x128xf32, #tpu.memory_space<vmem>>, vector<1x8x128xf32>
    %1 = vector.shape_cast %0 : vector<1x8x128xf32> to vector<8x128xf32>
    %c0_2 = arith.constant 0 : index
    %c0_3 = arith.constant 0 : index
    %c0_4 = arith.constant 0 : index
    %2 = vector.load %arg3[%c0_2, %c0_3, %c0_4] : memref<1x8x128xf32, #tpu.memory_space<vmem>>, vector<1x8x128xf32>
    %3 = vector.shape_cast %2 : vector<1x8x128xf32> to vector<8x128xf32>
    %4 = tpu.concatenate %1, %3 in 1 : vector<8x128xf32>, vector<8x128xf32> -> vector<8x256xf32>
    %5 = vector.extract_strided_slice %4 {offsets = [0, 0], sizes = [8, 128], strides = [1, 1]} : vector<8x256xf32> to vector<8x128xf32>
    %6 = vector.extract_strided_slice %4 {offsets = [0, 1], sizes = [8, 128], strides = [1, 1]} : vector<8x256xf32> to vector<8x128xf32>
    %7 = vector.extract_strided_slice %4 {offsets = [0, 2], sizes = [8, 128], strides = [1, 1]} : vector<8x256xf32> to vector<8x128xf32>
    %8 = tpu.concatenate %5, %6, %7 in 0 : vector<8x128xf32>, vector<8x128xf32>, vector<8x128xf32> -> vector<24x128xf32>
    %c0_5 = arith.constant 0 : index
    %c0_6 = arith.constant 0 : index
    %9 = vector.load %arg4[%c0_5, %c0_6] : memref<8x24xf32, #tpu.memory_space<vmem>>, vector<8x24xf32>
    %cst = arith.constant dense<0.000000e+00> : vector<8x128xf32>
    %10 = tpu.matmul %9, %8, %cst {dimension_numbers = #tpu.dot_dimension_numbers<[1], [0], [0], [1], [0, 0, 1, 1], [], []>} : vector<8x24xf32>, vector<24x128xf32>, vector<8x128xf32> -> vector<8x128xf32>
    %c0_7 = arith.constant 0 : index
    %c0_8 = arith.constant 0 : index
    %11 = vector.load %arg5[%c0_7, %c0_8] : memref<8x1xf32, #tpu.memory_space<vmem>>, vector<8x1xf32>
    %12 = vector.broadcast %11 : vector<8x1xf32> to vector<8x128xf32>
    %13 = arith.addf %10, %12 : vector<8x128xf32>
    %14 = arith.addf %13, %6 : vector<8x128xf32>
    %c0_9 = arith.constant 0 : index
    %c0_10 = arith.constant 0 : index
    %c0_11 = arith.constant 0 : index
    %15 = vector.load %arg6[%c0_9, %c0_10, %c0_11] : memref<1x8x128xf32, #tpu.memory_space<vmem>>, vector<1x8x128xf32>
    %16 = vector.shape_cast %15 : vector<1x8x128xf32> to vector<8x128xf32>
    %17 = vector.shape_cast %14 : vector<8x128xf32> to vector<1x8x128xf32>
    tpu.vector_store %arg6[%c0_9, %c0_10, %c0_11], %17 {strides = array<i32>} : memref<1x8x128xf32, #tpu.memory_space<vmem>>, vector<1x8x128xf32>,
    return
  }
  func.func @transform_0(%arg0: i32, %arg1: i32) -> (i32, i32, i32) {
    %c0_i32 = arith.constant 0 : i32
    %c0_i32_0 = arith.constant 0 : i32
    return %arg0, %c0_i32, %arg1 : i32, i32, i32
  }
  func.func @transform_1(%arg0: i32, %arg1: i32) -> (i32, i32, i32) {
    %c1_i32 = arith.constant 1 : i32
    %0 = arith.addi %arg1, %c1_i32 : i32
    %c1_i32_0 = arith.constant 1 : i32
    %1 = arith.muli %0, %c1_i32_0 : i32
    %c0_i32 = arith.constant 0 : i32
    %c0_i32_1 = arith.constant 0 : i32
    return %arg0, %c0_i32, %1 : i32, i32, i32
  }
  func.func @transform_2(%arg0: i32, %arg1: i32) -> (i32, i32) {
    %c0_i32 = arith.constant 0 : i32
    %c0_i32_0 = arith.constant 0 : i32
    %c0_i32_1 = arith.constant 0 : i32
    return %c0_i32, %c0_i32_0 : i32, i32
  }
  func.func @transform_3(%arg0: i32, %arg1: i32) -> (i32, i32) {
    %c0_i32 = arith.constant 0 : i32
    %c0_i32_0 = arith.constant 0 : i32
    %c0_i32_1 = arith.constant 0 : i32
    return %c0_i32, %c0_i32_0 : i32, i32
  }
  func.func @transform_4(%arg0: i32, %arg1: i32) -> (i32, i32, i32) {
    %c0_i32 = arith.constant 0 : i32
    %c0_i32_0 = arith.constant 0 : i32
    return %arg0, %c0_i32, %arg1 : i32, i32, i32
  }
}

</mosaic_0001>

<llo_original>
// kernel: tpu_custom_call.1
$region0: #{tpu_custom_call.1}
  #allocation0 [shape = 'u32[]', space=smem, size = 0x4, offset = 0x4, fixed_abs, tag = 'smem constant byte address 0x4 - core index']
  #allocation1 [shape = 'u32[72,128]{1,0:T(1,128)}', space=vmem, size = 0x9000, scoped, tag = 'internal scratch']
  %s0 = inlined_call_operand.hbm [shape: f32[2,8,256], index: 0, kind: input, shape index: {}]
  %s1 = inlined_call_operand.hbm [shape: f32[2,8,256], index: 1, kind: input, shape index: {}]
  %s2 = inlined_call_operand.vmem [shape: f32[8,24], index: 2, kind: input, shape index: {}]
  %s3 = inlined_call_operand.vmem [shape: f32[8,1], index: 3, kind: input, shape index: {}]
  %s4 = inlined_call_operand.hbm [shape: f32[2,8,128], index: 4, kind: output, shape index: {}]
  %s5 = sld [smem:[#allocation0]]
  $region57: #{tpu_custom_call.1} parent=0
    _
  %s7 = ssub.s32 1, %s5
  %s8 = scalar_select 0, %s7, %s5
  $region1: #{tpu_custom_call.1} parent=0
    #allocation2 [shape = 'u8[8192]{0}', space=vmem, size = 0x2000, scoped, tag = 'input window, operand 0']
    #allocation3 [shape = 's32[2]{0}', space=sflag, size = 0x8, scoped, tag = 'scoped memory for tpu_custom_call.1']
    #allocation4 [shape = 's32[2]{0}', space=sflag, size = 0x8, scoped, tag = 'scoped memory for tpu_custom_call.1']
    #allocation5 [shape = 'u8[8192]{0}', space=vmem, size = 0x2000, scoped, tag = 'input window, operand 1']
    #allocation6 [shape = 's32[2]{0}', space=sflag, size = 0x8, scoped, tag = 'scoped memory for tpu_custom_call.1']
    #allocation7 [shape = 'u8[8192]{0}', space=vmem, size = 0x2000, scoped, tag = 'output window, operand 0']
    %9 = vsyncpa [#allocation3], 0
    %s10 = scalar_lea.sflag [#allocation3], 1
    %11 = vsyncpa %s10, 0
    %12 = vsyncpa [#allocation6], 0
    %s13 = scalar_lea.sflag [#allocation6], 1
    %14 = vsyncpa %s13, 0
    %15 = vsyncpa [#allocation4], 0
    %s16 = scalar_lea.sflag [#allocation4], 1
    %17 = vsyncpa %s16, 0
    loop: start=0, step=1, limit=4
    $region2: #{tpu_custom_call.1} parent=1 // loop_pre_header
      _
    $region3: #{tpu_custom_call.1} parent=1 // loop_header
      %s19 = sphi 0, %s23
      %p20 = scmp.ge.s32.totalorder %s19, 4
      %s26 = sphi 0, %s38
      %s27 = sphi 0, %s34
      %s28 = sphi 0, %s26
      %s29 = sphi 0, %s27
      %s30 = sphi 0, %s28
      %s31 = sphi 0, %s29
      %s43 = sphi 0, %s45
      %s46 = sphi 0, %s43
      %s47 = sphi 0, %s46
      %s63 = sphi 0, %s47
      %s73 = sphi 0, %s75
      %s76 = sphi 0, %s73
      %s77 = sphi 0, %s76
      %s93 = sphi 0, %s77
      %s97 = sphi 0, %s97
      %s99 = sphi 0, %s97
      %s100 = sphi 0, %s99
      %s114 = sphi 0, %s100
      %s118 = sphi 0, %s118
      %s120 = sphi 0, %s118
      %s121 = sphi 0, %s120
      %s135 = sphi 0, %s121
      %s143 = sphi 0, %s145
      %s146 = sphi 0, %s143
      %s147 = sphi 0, %s146
      %s163 = sphi 0, %s147
    $region4: #{tpu_custom_call.1} parent=1 // loop_header_branch
      %22 = sbr.rel (%p20) target = $region8
    $region5: #{tpu_custom_call.1} parent=1 // loop_body
      %s24 = ssub.s32 %s19, 1
      %s25 = ssub.s32 %s19, 2
      %s32 = sadd.s32 1, %s27
      %p33 = scmp.ge.s32.totalorder %s32, 1
      %s34 = scalar_select %p33, 0, %s32
      %s35 = sadd.s32 1, %s26
      %s36 = scalar_select %p33, %s35, %s26
      %p37 = scmp.ge.s32.totalorder %s36, 2
      %s38 = scalar_select %p37, 0, %s36
      %s39 = ssub.s32 %s26, %s38
      %s40 = ssub.s32 %s27, %s34
      %s41 = sor.u32 %s39, %s40
      %p42 = scmp.eq.s32.totalorder %s41, 0
      %s44 = sadd.s32 %s43, 1
      %s45 = scalar_select %p42, %s43, %s44
      %p48 = pneg %p42
      %p49 = scmp.eq.s32.totalorder %s19, 1
      %p50 = por %p48, %p49
      %p51 = scmp.ne.s32.totalorder %s43, %s46
      %p52 = scmp.eq.s32.totalorder %s19, 0
      %p53 = por %p51, %p52
      %p54 = scmp.ne.s32.totalorder %s43, %s46
      %p55 = scmp.eq.s32.totalorder %s24, 1
      %p56 = por %p54, %p55
      %p57 = scmp.ne.s32.totalorder %s46, %s47
      %p58 = scmp.eq.s32.totalorder %s24, 0
      %p59 = por %p57, %p58
      %p60 = scmp.ne.s32.totalorder %s46, %s47
      %p61 = scmp.eq.s32.totalorder %s25, 1
      %p62 = por %p60, %p61
      %p64 = scmp.ne.s32.totalorder %s47, %s63
      %p65 = scmp.eq.s32.totalorder %s25, 0
      %p66 = por %p64, %p65
      %s67 = sadd.s32 %s27, 1
      %s68 = sadd.s32 %s34, 1
      %s69 = ssub.s32 %s26, %s38
      %s70 = ssub.s32 %s67, %s68
      %s71 = sor.u32 %s69, %s70
      %p72 = scmp.eq.s32.totalorder %s71, 0
      %s74 = sadd.s32 %s73, 1
      %s75 = scalar_select %p72, %s73, %s74
      %p78 = pneg %p72
      %p79 = scmp.eq.s32.totalorder %s19, 1
      %p80 = por %p78, %p79
      %p81 = scmp.ne.s32.totalorder %s73, %s76
      %p82 = scmp.eq.s32.totalorder %s19, 0
      %p83 = por %p81, %p82
      %p84 = scmp.ne.s32.totalorder %s73, %s76
      %p85 = scmp.eq.s32.totalorder %s24, 1
      %p86 = por %p84, %p85
      %p87 = scmp.ne.s32.totalorder %s76, %s77
      %p88 = scmp.eq.s32.totalorder %s24, 0
      %p89 = por %p87, %p88
      %p90 = scmp.ne.s32.totalorder %s76, %s77
      %p91 = scmp.eq.s32.totalorder %s25, 1
      %p92 = por %p90, %p91
      %p94 = scmp.ne.s32.totalorder %s77, %s93
      %p95 = scmp.eq.s32.totalorder %s25, 0
      %p96 = por %p94, %p95
      %s98 = sadd.s32 %s97, 1
      %p101 = scmp.eq.s32.totalorder %s19, 1
      %p102 = scmp.ne.s32.totalorder %s97, %s99
      %p103 = scmp.eq.s32.totalorder %s19, 0
      %p104 = por %p102, %p103
      %p105 = scmp.ne.s32.totalorder %s97, %s99
      %p106 = scmp.eq.s32.totalorder %s24, 1
      %p107 = por %p105, %p106
      %p108 = scmp.ne.s32.totalorder %s99, %s100
      %p109 = scmp.eq.s32.totalorder %s24, 0
      %p110 = por %p108, %p109
      %p111 = scmp.ne.s32.totalorder %s99, %s100
      %p112 = scmp.eq.s32.totalorder %s25, 1
      %p113 = por %p111, %p112
      %p115 = scmp.ne.s32.totalorder %s100, %s114
      %p116 = scmp.eq.s32.totalorder %s25, 0
      %p117 = por %p115, %p116
      %s119 = sadd.s32 %s118, 1
      %p122 = scmp.eq.s32.totalorder %s19, 1
      %p123 = scmp.ne.s32.totalorder %s118, %s120
      %p124 = scmp.eq.s32.totalorder %s19, 0
      %p125 = por %p123, %p124
      %p126 = scmp.ne.s32.totalorder %s118, %s120
      %p127 = scmp.eq.s32.totalorder %s24, 1
      %p128 = por %p126, %p127
      %p129 = scmp.ne.s32.totalorder %s120, %s121
      %p130 = scmp.eq.s32.totalorder %s24, 0
      %p131 = por %p129, %p130
      %p132 = scmp.ne.s32.totalorder %s120, %s121
      %p133 = scmp.eq.s32.totalorder %s25, 1
      %p134 = por %p132, %p133
      %p136 = scmp.ne.s32.totalorder %s121, %s135
      %p137 = scmp.eq.s32.totalorder %s25, 0
      %p138 = por %p136, %p137
      %s139 = ssub.s32 %s26, %s38
      %s140 = ssub.s32 %s27, %s34
      %s141 = sor.u32 %s139, %s140
      %p142 = scmp.eq.s32.totalorder %s141, 0
      %s144 = sadd.s32 %s143, 1
      %s145 = scalar_select %p142, %s143, %s144
      %p148 = pneg %p142
      %p149 = scmp.eq.s32.totalorder %s19, 1
      %p150 = por %p148, %p149
      %p151 = scmp.ne.s32.totalorder %s143, %s146
      %p152 = scmp.eq.s32.totalorder %s19, 0
      %p153 = por %p151, %p152
      %p154 = scmp.ne.s32.totalorder %s143, %s146
      %p155 = scmp.eq.s32.totalorder %s24, 1
      %p156 = por %p154, %p155
      %p157 = scmp.ne.s32.totalorder %s146, %s147
      %p158 = scmp.eq.s32.totalorder %s24, 0
      %p159 = por %p157, %p158
      %p160 = scmp.ne.s32.totalorder %s146, %s147
      %p161 = scmp.eq.s32.totalorder %s25, 1
      %p162 = por %p160, %p161
      %p164 = scmp.ne.s32.totalorder %s147, %s163
      %p165 = scmp.eq.s32.totalorder %s25, 0
      %p166 = por %p164, %p165
      %p167 = scmp.le.s32.totalorder 1, %s19
      %p168 = scmp.lt.s32.totalorder %s19, 3
      %p169 = pnand %p167, %p168
      %p170 = pneg %p169
      // Predicated region
      $region9: #{tpu_custom_call.1} parent=5 // pred_check
        _
      $region10: #{tpu_custom_call.1} parent=5 // pred_check_branch
        %172 = sbr.rel (%p169) target = $region12
      $region11: #{tpu_custom_call.1} parent=5 // pred_region
        %s173 = ssub.s32 %s19, 1
        // Predicated region
        $region13: #{tpu_custom_call.1} parent=11 // pred_check
          %p174 = pneg %p110
        $region14: #{tpu_custom_call.1} parent=11 // pred_check_branch
          %176 = sbr.rel (%p174) target = $region16
        $region15: #{tpu_custom_call.1} parent=11 // pred_region
          _
        $region16: #{tpu_custom_call.1} parent=11 // pred_fallthru
          _
        // Predicated region
        $region17: #{tpu_custom_call.1} parent=11 // pred_check
          %p177 = pneg %p131
        $region18: #{tpu_custom_call.1} parent=11 // pred_check_branch
          %179 = sbr.rel (%p177) target = $region20
        $region19: #{tpu_custom_call.1} parent=11 // pred_region
          _
        $region20: #{tpu_custom_call.1} parent=11 // pred_fallthru
          _
      $region12: #{tpu_custom_call.1} parent=5 // pred_fallthru
        _
      %p180 = scmp.lt.s32.totalorder %s19, 2
      // Predicated region
      $region21: #{tpu_custom_call.1} parent=5 // pred_check
        %p181 = pneg %p180
      $region22: #{tpu_custom_call.1} parent=5 // pred_check_branch
        %183 = sbr.rel (%p181) target = $region24
      $region23: #{tpu_custom_call.1} parent=5 // pred_region
        // Predicated region
        $region25: #{tpu_custom_call.1} parent=23 // pred_check
          %p184 = pneg %p53
        $region26: #{tpu_custom_call.1} parent=23 // pred_check_branch
          %186 = sbr.rel (%p184) target = $region28
        $region27: #{tpu_custom_call.1} parent=23 // pred_region
          %s187 = sand.u32 %s43, 1
          %s188 = scalar_lea.sflag [#allocation3], %s187
          %s189 = sand.u32 %s43, 1
          %s190 = smul.addr %s189, 8
          %s191 = scalar_lea.vmem [#allocation2], %s190
          %193 = vsyncadd %s188, 0
          %s194 = smul.addr %s26, 2
          %s195 = sadd.s32 %s27, %s194
          %s196 = smul.addr %s195, 8
          %s197 = scalar_lea.hbm %s0, %s196
          %s199 = sshll.u32 %s197, 4
          %s200 = int_to_ptr.hbm [resolvable:$true] %s199
          %s201 = sshll.u32 %s191, 4
          %s202 = int_to_ptr.vmem [resolvable:$true] %s201
          %204 = dma.hbm_to_vmem [thread:$0]  %s200, 128, %s202, %s188
        $region28: #{tpu_custom_call.1} parent=23 // pred_fallthru
          _
        // Predicated region
        $region29: #{tpu_custom_call.1} parent=23 // pred_check
          %p205 = pneg %p83
        $region30: #{tpu_custom_call.1} parent=23 // pred_check_branch
          %207 = sbr.rel (%p205) target = $region32
        $region31: #{tpu_custom_call.1} parent=23 // pred_region
          %s208 = sand.u32 %s73, 1
          %s209 = scalar_lea.sflag [#allocation6], %s208
          %s210 = sand.u32 %s73, 1
          %s211 = smul.addr %s210, 8
          %s212 = scalar_lea.vmem [#allocation5], %s211
          %s213 = sadd.s32 %s27, 1
          %215 = vsyncadd %s209, 0
          %s216 = smul.addr %s26, 2
          %s217 = sadd.s32 %s213, %s216
          %s218 = smul.addr %s217, 8
          %s219 = scalar_lea.hbm %s1, %s218
          %s221 = sshll.u32 %s219, 4
          %s222 = int_to_ptr.hbm [resolvable:$true] %s221
          %s223 = sshll.u32 %s212, 4
          %s224 = int_to_ptr.vmem [resolvable:$true] %s223
          %226 = dma.hbm_to_vmem [thread:$0]  %s222, 128, %s224, %s209
        $region32: #{tpu_custom_call.1} parent=23 // pred_fallthru
          _
      $region24: #{tpu_custom_call.1} parent=5 // pred_fallthru
        _
      %p227 = scmp.le.s32.totalorder 1, %s19
      %p228 = scmp.lt.s32.totalorder %s19, 3
      %p229 = pnand %p227, %p228
      %p230 = pneg %p229
      // Predicated region
      $region33: #{tpu_custom_call.1} parent=5 // pred_check
        _
      $region34: #{tpu_custom_call.1} parent=5 // pred_check_branch
        %232 = sbr.rel (%p229) target = $region36
      $region35: #{tpu_custom_call.1} parent=5 // pred_region
        %s233 = ssub.s32 %s19, 1
        %s234 = sand.u32 %s46, 1
        %s235 = scalar_lea.sflag [#allocation3], %s234
        %s236 = sand.u32 %s46, 1
        %s237 = smul.addr %s236, 8
        %s238 = scalar_lea.vmem [#allocation2], %s237
        // Predicated region
        $region37: #{tpu_custom_call.1} parent=35 // pred_check
          %p239 = pneg %p59
        $region38: #{tpu_custom_call.1} parent=35 // pred_check_branch
          %241 = sbr.rel (%p239) target = $region40
        $region39: #{tpu_custom_call.1} parent=35 // pred_region
          %243 = dma.done %s235, 128
        $region40: #{tpu_custom_call.1} parent=35 // pred_fallthru
          _
        %s244 = sand.u32 %s76, 1
        %s245 = scalar_lea.sflag [#allocation6], %s244
        %s246 = sand.u32 %s76, 1
        %s247 = smul.addr %s246, 8
        %s248 = scalar_lea.vmem [#allocation5], %s247
        // Predicated region
        $region41: #{tpu_custom_call.1} parent=35 // pred_check
          %p249 = pneg %p89
        $region42: #{tpu_custom_call.1} parent=35 // pred_check_branch
          %251 = sbr.rel (%p249) target = $region44
        $region43: #{tpu_custom_call.1} parent=35 // pred_region
          %253 = dma.done %s245, 128
        $region44: #{tpu_custom_call.1} parent=35 // pred_fallthru
          _
        %s254 = sand.u32 %s46, 1
        %s255 = scalar_lea.sflag [#allocation3], %s254
        %s256 = sand.u32 %s46, 1
        %s257 = smul.addr %s256, 8
        %s258 = scalar_lea.vmem [#allocation2], %s257
        %p259 = pneg %p59
        %p260 = pneg %p56
        %s261 = sand.u32 %s76, 1
        %s262 = scalar_lea.sflag [#allocation6], %s261
        %s263 = sand.u32 %s76, 1
        %s264 = smul.addr %s263, 8
        %s265 = scalar_lea.vmem [#allocation5], %s264
        %p266 = pneg %p89
        %p267 = pneg %p86
        %p268 = pneg %p110
        %p269 = pneg %p107
        %p270 = pneg %p131
        %p271 = pneg %p128
        %p272 = pneg %p159
        %p273 = pneg %p156
        %s274 = sand.u32 %s146, 1
        %s275 = scalar_lea.sflag [#allocation4], %s274
        %s276 = sand.u32 %s146, 1
        %s277 = smul.addr %s276, 8
        %s278 = scalar_lea.vmem [#allocation7], %s277
        %s279 = sadd.s32 %s29, 1
        %v280 = vld [vmem:[%s238] sm:$0xff]
        %v281 = vld [vmem:[%s248] sm:$0xff]
        %284 = vrot.lane.b32.xlu0 %v280, 127
        %v285 = vpop.permute.xlu0 %284
        %286 = vrot.lane.b32.xlu0 %v281, 127
        %v287 = vpop.permute.xlu0 %286
        %vm288 = vcmask 1039360
        %v289 = vsel %vm288, %v285, %v287
        %291 = vrot.lane.b32.xlu0 %v280, 126
        %v292 = vpop.permute.xlu0 %291
        %293 = vrot.lane.b32.xlu0 %v281, 126
        %v294 = vpop.permute.xlu0 %293
        %vm295 = vcmask 1031168
        %v296 = vsel %vm295, %v292, %v294
        %v298 = vld [vmem:[%s2] sm:$0xff]
        %v299 = vld [vmem:[%s3] sm:$0xff]
        %301 = vset.pattern.permute.xlu0 0
        %302 = vperm.xlu0 %301, %v299
        %v303 = vpop.permute.xlu0 %302
        %vm305 = vcmask 195584
        %v307 = vsel %vm305, %v298, 0
        %309 = vmatpush.msra.mxu0 0.0
        %310 = vmatpush.msra.mxu0 0.0
        %311 = vmatpush.msra.mxu0 0.0
        %312 = vmatpush.msra.mxu0 0.0
        %313 = vmatpush.msra.mxu0 0.0
        %314 = vmatpush.msra.mxu0 0.0
        %315 = vmatpush.msra.mxu0 0.0
        %316 = vmatpush.msra.mxu0 0.0
        %317 = vmatpush.msra.mxu0 0.0
        %318 = vmatpush.msra.mxu0 0.0
        %319 = vmatpush.msra.mxu0 0.0
        %320 = vmatpush.msra.mxu0 0.0
        %321 = vmatpush.msra.mxu0 0.0
        %322 = vmatpush.msra.mxu0 %v296
        %323 = vmatpush.msra.mxu0 %v289
        %324 = vmatpush.msra.mxu0 %v280
        %325 = vmatmul.f32.gmra.mxu0 %v307
        %v326 = vpop.f32.mrf.mxu0
        %v327 = vadd.f32 %v303, %v326
        %328 = vdwg.mxu0
        %v329 = vadd.f32 %v327, %v289
        %330 = vst [vmem:[%s278] sm:$0xff] %v329
        %s331 = sand.u32 %s146, 1
        %s332 = scalar_lea.sflag [#allocation4], %s331
        %s333 = sand.u32 %s146, 1
        %s334 = smul.addr %s333, 8
        %s335 = scalar_lea.vmem [#allocation7], %s334
        // Predicated region
        $region45: #{tpu_custom_call.1} parent=35 // pred_check
          %p336 = pneg %p156
        $region46: #{tpu_custom_call.1} parent=35 // pred_check_branch
          %338 = sbr.rel (%p336) target = $region48
        $region47: #{tpu_custom_call.1} parent=35 // pred_region
          %340 = vsyncadd %s332, 0
          %s341 = sadd.s32 %s29, %s28
          %s342 = smul.addr %s341, 8
          %s343 = scalar_lea.hbm %s4, %s342
          %s345 = sshll.u32 %s335, 4
          %s346 = int_to_ptr.vmem [resolvable:$true] %s345
          %s347 = sshll.u32 %s343, 4
          %s348 = int_to_ptr.hbm [resolvable:$true] %s347
          %350 = dma.vmem_to_hbm [thread:$0]  %s346, 128, %s348, %s332
        $region48: #{tpu_custom_call.1} parent=35 // pred_fallthru
          _
      $region36: #{tpu_custom_call.1} parent=5 // pred_fallthru
        _
      %p351 = scmp.le.s32.totalorder 2, %s19
      // Predicated region
      $region49: #{tpu_custom_call.1} parent=5 // pred_check
        %p352 = pneg %p351
      $region50: #{tpu_custom_call.1} parent=5 // pred_check_branch
        %354 = sbr.rel (%p352) target = $region52
      $region51: #{tpu_custom_call.1} parent=5 // pred_region
        %s355 = ssub.s32 %s19, 2
        // Predicated region
        $region53: #{tpu_custom_call.1} parent=51 // pred_check
          %p356 = pneg %p162
        $region54: #{tpu_custom_call.1} parent=51 // pred_check_branch
          %358 = sbr.rel (%p356) target = $region56
        $region55: #{tpu_custom_call.1} parent=51 // pred_region
          %s359 = sand.u32 %s147, 1
          %s360 = scalar_lea.sflag [#allocation4], %s359
          %s361 = sand.u32 %s147, 1
          %s362 = smul.addr %s361, 8
          %s363 = scalar_lea.vmem [#allocation7], %s362
          %365 = dma.done %s360, 128
        $region56: #{tpu_custom_call.1} parent=51 // pred_fallthru
          _
      $region52: #{tpu_custom_call.1} parent=5 // pred_fallthru
        _
    $region6: #{tpu_custom_call.1} parent=1 // loop_footer
      %s23 = sadd.s32 1, %s19
    $region7: #{tpu_custom_call.1} parent=1 // loop_footer_branch
      %18 = sbr.rel target = $region3
    $region8: #{tpu_custom_call.1} parent=1 // loop_exit
      _
    %366 = vsyncpa [#allocation3], 1
    %s367 = scalar_lea.sflag [#allocation3], 1
    %368 = vsyncpa %s367, 1
    %369 = vsyncpa [#allocation6], 1
    %s370 = scalar_lea.sflag [#allocation6], 1
    %371 = vsyncpa %s370, 1
    %372 = vsyncpa [#allocation4], 1
    %s373 = scalar_lea.sflag [#allocation4], 1
    %374 = vsyncpa %s373, 1

</llo_original>
